<compile_context>
chip_gen: v7x
topology: tpu7x:2x2x1
jax: 0.10.0
libtpu: 0.0.40
codegen_flags: <defaults>
</compile_context>

<pallas_src>
import math
import functools

import jax
import jax.numpy as jnp
from jax.experimental import pallas as pl
from jax.experimental.pallas import tpu as pltpu

HIDDEN_SIZE = 256
LEAK = 0.1
STANDARDIZED_OB_CLAMPS = (-5.0, 5.0)


def _leaky_relu(x, leak):
    return jnp.where(x > 0, x, leak * x)


def prednet_kernel(obs_ref, acs_ref, lo_ref, hi_ref,
                   w1o_ref, w1a_ref, b1_ref, w2_ref, b2_ref, w3_ref, b3_ref,
                   out_ref, *, compute_dtype):
    # Standardize + clamp folded into raw-space clamp bounds and a scaled
    # W1_obs / adjusted b1 (done once in prepare_params): pure VPU min/max
    # here, no divide, no per-column scale/shift vectors.
    o = jnp.minimum(jnp.maximum(obs_ref[...], lo_ref[...]), hi_ref[...])

    # fc_block_1: two accumulated MXU matmuls (obs part + acs part),
    # f32 accumulation. Avoids a wrapper-side concat of obs|acs.
    h = (jnp.dot(o.astype(compute_dtype), w1o_ref[...],
                 preferred_element_type=jnp.float32)
         + jnp.dot(acs_ref[...].astype(compute_dtype), w1a_ref[...],
                   preferred_element_type=jnp.float32)
         + b1_ref[...])
    h = _leaky_relu(h, LEAK)

    # fc_block_2
    h = jnp.dot(h.astype(compute_dtype), w2_ref[...],
                preferred_element_type=jnp.float32) + b2_ref[...]
    h = _leaky_relu(h, LEAK)

    # fc_block_3
    h = jnp.dot(h.astype(compute_dtype), w3_ref[...],
                preferred_element_type=jnp.float32) + b3_ref[...]
    h = _leaky_relu(h, LEAK)

    out_ref[...] = h.astype(out_ref.dtype)


def _round_up(x, m):
    return ((x + m - 1) // m) * m


def _choose_tb(B):
    """Batch tile:
      * B <= 32   : single grid step (per-step overhead dominates),
      * B <= 256  : two grid steps so the 'parallel' axis shards across both
                    v7x TensorCores (weights re-fetch is negligible),
      * larger B  : tiles of up to 512 rows (multiple of 128 to match the
                    MXU M dim, incl. v5e's 128-wide MXU)."""
    if B <= 32:
        return B
    if B <= 256:
        return _round_up(-(-B // 2), 8)
    if B <= 1024:
        return min(512, _round_up(-(-B // 2), 128))
    return 512


def prepare_params(params, use_bf16=True):
    """One-time parameter preparation (call OUTSIDE the per-step forward).

    Folds the running-mean-std standardization into W1_obs / b1 and into
    raw-space clamp bounds, splits W1 into its obs/acs column blocks, and
    converts the weights to the MXU compute dtype ONCE so no convert op runs
    per forward call. bf16 inputs + f32 accumulation pay off on v5e/v6e/v7x
    alike (halved weight DMA, bf16-native MXU)."""
    cd = jnp.bfloat16 if use_bf16 else jnp.float32
    mean = params["rms_mean"].astype(jnp.float32)
    std = params["rms_std"].astype(jnp.float32)
    inv_std = 1.0 / std
    ob_dim = mean.shape[0]

    w1 = params["w1"].astype(jnp.float32)
    w1_obs, w1_acs = w1[:ob_dim], w1[ob_dim:]
    H = w1.shape[1]

    lo, hi = STANDARDIZED_OB_CLAMPS
    return {
        # clamp((x-m)/s, lo, hi) == (clamp(x, m+lo*s, m+hi*s) - m)/s   (s > 0)
        "lo": (mean + lo * std).reshape(1, ob_dim),
        "hi": (mean + hi * std).reshape(1, ob_dim),
        # ((x-m)/s) @ W1_obs == x @ (W1_obs * (1/s)[:,None]) - (m/s) @ W1_obs
        "w1o": (w1_obs * inv_std[:, None]).astype(cd),
        "w1a": w1_acs.astype(cd),
        "b1": (params["b1"].astype(jnp.float32)
               - (mean * inv_std) @ w1_obs).reshape(1, H),
        "w2": params["w2"].astype(cd),
        "b2": params["b2"].reshape(1, H).astype(jnp.float32),
        "w3": params["w3"].astype(cd),
        "b3": params["b3"].reshape(1, H).astype(jnp.float32),
    }


@functools.partial(jax.jit, static_argnames=("tb", "out_dtype"))
def prednet_forward(obs, acs, prepared, tb=None, out_dtype=jnp.float32):
    """obs: [B, ob_dim] f32, acs: [B, ac_dim] f32, prepared: prepare_params()."""
    B, ob_dim = obs.shape
    _, ac_dim = acs.shape
    H = prepared["w2"].shape[0]
    compute_dtype = prepared["w2"].dtype
    if tb is None:
        tb = _choose_tb(B)

    grid = (pl.cdiv(B, tb),)
    row = lambda i: (i, 0)          # batch-tiled operands
    rep = lambda i: (0, 0)          # replicated (resident) operands

    D = ob_dim + ac_dim
    w_item = jnp.dtype(compute_dtype).itemsize
    out_item = jnp.dtype(out_dtype).itemsize
    cost = pl.CostEstimate(
        flops=2 * B * (D + 2 * H) * H,
        transcendentals=0,
        bytes_accessed=(4 * B * D + out_item * B * H
                        + w_item * (D * H + 2 * H * H)
                        + 4 * (3 * H + 2 * ob_dim)))

    kernel = functools.partial(prednet_kernel, compute_dtype=compute_dtype)

    return pl.pallas_call(
        kernel,
        out_shape=jax.ShapeDtypeStruct((B, H), out_dtype),
        grid_spec=pltpu.PrefetchScalarGridSpec(
            num_scalar_prefetch=0,
            grid=grid,
            in_specs=[
                pl.BlockSpec((tb, ob_dim), row),   # raw obs
                pl.BlockSpec((tb, ac_dim), row),   # acs
                pl.BlockSpec((1, ob_dim), rep),    # clamp lo (raw space)
                pl.BlockSpec((1, ob_dim), rep),    # clamp hi (raw space)
                pl.BlockSpec((ob_dim, H), rep),    # W1[:ob]  * (1/std)
                pl.BlockSpec((ac_dim, H), rep),    # W1[ob:]
                pl.BlockSpec((1, H), rep),         # b1 (mean-shift folded)
                pl.BlockSpec((H, H), rep),         # W2
                pl.BlockSpec((1, H), rep),         # b2
                pl.BlockSpec((H, H), rep),         # W3
                pl.BlockSpec((1, H), rep),         # b3
            ],
            out_specs=pl.BlockSpec((tb, H), row),
        ),
        compiler_params=pltpu.CompilerParams(
            dimension_semantics=("parallel",)),
        cost_estimate=cost,
    )(obs, acs, prepared["lo"], prepared["hi"],
      prepared["w1o"], prepared["w1a"], prepared["b1"],
      prepared["w2"], prepared["b2"], prepared["w3"], prepared["b3"])


def init_params(key, ob_dim, ac_dim):
    """Deterministic synthetic init mirroring the module's parameter shapes."""
    gain = math.sqrt(2.0) / math.sqrt(1.0 + LEAK ** 2)
    d_in = ob_dim + ac_dim
    k = jax.random.split(key, 8)
    return {
        "w1": gain / math.sqrt(d_in) * jax.random.normal(
            k[0], (d_in, HIDDEN_SIZE), jnp.float32),
        "b1": jnp.zeros((HIDDEN_SIZE,), jnp.float32),
        "w2": gain / math.sqrt(HIDDEN_SIZE) * jax.random.normal(
            k[1], (HIDDEN_SIZE, HIDDEN_SIZE), jnp.float32),
        "b2": jnp.zeros((HIDDEN_SIZE,), jnp.float32),
        "w3": gain / math.sqrt(HIDDEN_SIZE) * jax.random.normal(
            k[2], (HIDDEN_SIZE, HIDDEN_SIZE), jnp.float32),
        "b3": jnp.zeros((HIDDEN_SIZE,), jnp.float32),
        # running-mean-std observation normalizer statistics
        # TODO(synk): production RMS normalizers usually add an epsilon to std;
        # kept as plain 1/std to match the reference module exactly.
        "rms_mean": 0.1 * jax.random.normal(k[3], (ob_dim,), jnp.float32),
        "rms_std": 1.0 + 0.1 * jax.random.uniform(k[4], (ob_dim,), jnp.float32),
    }


def prednet_reference(obs, acs, params):
    """Pure-JAX reference for correctness check (matches PyTorch forward)."""
    o = (obs - params["rms_mean"]) / params["rms_std"]
    o = jnp.clip(o, *STANDARDIZED_OB_CLAMPS)
    x = jnp.concatenate([o, acs], axis=-1)
    h = x @ params["w1"] + params["b1"]
    h = jnp.where(h > 0, h, LEAK * h)
    h = h @ params["w2"] + params["b2"]
    h = jnp.where(h > 0, h, LEAK * h)
    h = h @ params["w3"] + params["b3"]
    h = jnp.where(h > 0, h, LEAK * h)
    return h


if __name__ == "__main__":
    key = jax.random.PRNGKey(0)
    k_obs, k_acs, k_par, k_obs2, k_acs2 = jax.random.split(key, 5)

    OB_DIM, AC_DIM = 16, 8     # env.observation_space / action_space dims
    params = init_params(k_par, OB_DIM, AC_DIM)

    # --- f32 compute path, small batch (single grid step), tight tolerance ---
    prep_f32 = prepare_params(params, use_bf16=False)
    B = 16
    obs = jax.random.normal(k_obs, (B, OB_DIM), jnp.float32) * 3.0
    acs = jax.random.normal(k_acs, (B, AC_DIM), jnp.float32)
    ref = prednet_reference(obs, acs, params)

    out = jax.block_until_ready(prednet_forward(obs, acs, prep_f32))
    assert out.shape == (B, HIDDEN_SIZE), out.shape
    assert jnp.allclose(out, ref, atol=1e-4, rtol=1e-4), \
        float(jnp.max(jnp.abs(out - ref)))

    # --- non-divisible batch: B=44 -> tb=24, grid=2, partial final block ---
    B2 = 44
    obs2 = jax.random.normal(k_obs2, (B2, OB_DIM), jnp.float32) * 3.0
    acs2 = jax.random.normal(k_acs2, (B2, AC_DIM), jnp.float32)
    ref2 = prednet_reference(obs2, acs2, params)

    out2 = jax.block_until_ready(prednet_forward(obs2, acs2, prep_f32))
    assert out2.shape == (B2, HIDDEN_SIZE), out2.shape
    assert jnp.allclose(out2, ref2, atol=1e-4, rtol=1e-4), \
        float(jnp.max(jnp.abs(out2 - ref2)))

    # --- bf16 MXU path (recommended on v5e/v6e/v7x), f32 accumulation ---
    # Note: acs columns are not standardized, so very large-magnitude actions
    # lose relative precision in bf16; acceptable for RND-style prediction.
    prep_bf16 = prepare_params(params, use_bf16=True)
    out_bf = jax.block_until_ready(prednet_forward(obs, acs, prep_bf16))
    assert out_bf.shape == (B, HIDDEN_SIZE)
    assert bool(jnp.all(jnp.isfinite(out_bf)))
    assert jnp.allclose(out_bf, ref, atol=1.0, rtol=0.1), \
        float(jnp.max(jnp.abs(out_bf - ref)))

    print("KERNEL_OK")
</pallas_src>

<mosaic_0001>
module attributes {stable_mosaic.version = 11 : i64} {
  func.func @prednet_kernel(%arg0: i32, %arg1: memref<16x16xf32, #tpu.memory_space<vmem>>, %arg2: memref<16x8xf32, #tpu.memory_space<vmem>>, %arg3: memref<1x16xf32, #tpu.memory_space<vmem>>, %arg4: memref<1x16xf32, #tpu.memory_space<vmem>>, %arg5: memref<16x256xf32, #tpu.memory_space<vmem>>, %arg6: memref<8x256xf32, #tpu.memory_space<vmem>>, %arg7: memref<1x256xf32, #tpu.memory_space<vmem>>, %arg8: memref<256x256xf32, #tpu.memory_space<vmem>>, %arg9: memref<1x256xf32, #tpu.memory_space<vmem>>, %arg10: memref<256x256xf32, #tpu.memory_space<vmem>>, %arg11: memref<1x256xf32, #tpu.memory_space<vmem>>, %arg12: memref<16x256xf32, #tpu.memory_space<vmem>>) attributes {dimension_semantics = [#tpu.dimension_semantics<parallel>], iteration_bounds = array<i64: 1>, scalar_prefetch = 0 : i64, scratch_operands = 0 : i64, tpu.core_type = #tpu.core_type<tc>, window_params = [{transform_indices = @transform_0, window_bounds = array<i64: 16, 16>}, {transform_indices = @transform_1, window_bounds = array<i64: 16, 8>}, {pipeline_mode = #tpu.pipeline_mode<synchronous>, transform_indices = @transform_2, window_bounds = array<i64: 1, 16>}, {pipeline_mode = #tpu.pipeline_mode<synchronous>, transform_indices = @transform_3, window_bounds = array<i64: 1, 16>}, {pipeline_mode = #tpu.pipeline_mode<synchronous>, transform_indices = @transform_4, window_bounds = array<i64: 16, 256>}, {pipeline_mode = #tpu.pipeline_mode<synchronous>, transform_indices = @transform_5, window_bounds = array<i64: 8, 256>}, {pipeline_mode = #tpu.pipeline_mode<synchronous>, transform_indices = @transform_6, window_bounds = array<i64: 1, 256>}, {pipeline_mode = #tpu.pipeline_mode<synchronous>, transform_indices = @transform_7, window_bounds = array<i64: 256, 256>}, {pipeline_mode = #tpu.pipeline_mode<synchronous>, transform_indices = @transform_8, window_bounds = array<i64: 1, 256>}, {pipeline_mode = #tpu.pipeline_mode<synchronous>, transform_indices = @transform_9, window_bounds = array<i64: 256, 256>}, {pipeline_mode = #tpu.pipeline_mode<synchronous>, transform_indices = @transform_10, window_bounds = array<i64: 1, 256>}, {transform_indices = @transform_11, window_bounds = array<i64: 16, 256>}]} {
    %c0 = arith.constant 0 : index
    %c0_0 = arith.constant 0 : index
    %0 = vector.load %arg1[%c0, %c0_0] : memref<16x16xf32, #tpu.memory_space<vmem>>, vector<16x16xf32>
    %c0_1 = arith.constant 0 : index
    %c0_2 = arith.constant 0 : index
    %1 = vector.load %arg3[%c0_1, %c0_2] : memref<1x16xf32, #tpu.memory_space<vmem>>, vector<1x16xf32>
    %2 = vector.broadcast %1 : vector<1x16xf32> to vector<16x16xf32>
    %3 = arith.maximumf %0, %2 : vector<16x16xf32>
    %c0_3 = arith.constant 0 : index
    %c0_4 = arith.constant 0 : index
    %4 = vector.load %arg4[%c0_3, %c0_4] : memref<1x16xf32, #tpu.memory_space<vmem>>, vector<1x16xf32>
    %5 = vector.broadcast %4 : vector<1x16xf32> to vector<16x16xf32>
    %6 = arith.minimumf %3, %5 : vector<16x16xf32>
    %c0_5 = arith.constant 0 : index
    %c0_6 = arith.constant 0 : index
    %7 = vector.load %arg5[%c0_5, %c0_6] : memref<16x256xf32, #tpu.memory_space<vmem>>, vector<16x256xf32>
    %cst = arith.constant dense<0.000000e+00> : vector<16x256xf32>
    %8 = tpu.matmul %6, %7, %cst {dimension_numbers = #tpu.dot_dimension_numbers<[1], [0], [0], [1], [0, 0, 1, 1], [], []>} : vector<16x16xf32>, vector<16x256xf32>, vector<16x256xf32> -> vector<16x256xf32>
    %c0_7 = arith.constant 0 : index
    %c0_8 = arith.constant 0 : index
    %9 = vector.load %arg2[%c0_7, %c0_8] : memref<16x8xf32, #tpu.memory_space<vmem>>, vector<16x8xf32>
    %c0_9 = arith.constant 0 : index
    %c0_10 = arith.constant 0 : index
    %10 = vector.load %arg6[%c0_9, %c0_10] : memref<8x256xf32, #tpu.memory_space<vmem>>, vector<8x256xf32>
    %cst_11 = arith.constant dense<0.000000e+00> : vector<16x256xf32>
    %11 = tpu.matmul %9, %10, %cst_11 {dimension_numbers = #tpu.dot_dimension_numbers<[1], [0], [0], [1], [0, 0, 1, 1], [], []>} : vector<16x8xf32>, vector<8x256xf32>, vector<16x256xf32> -> vector<16x256xf32>
    %12 = arith.addf %8, %11 : vector<16x256xf32>
    %c0_12 = arith.constant 0 : index
    %c0_13 = arith.constant 0 : index
    %13 = vector.load %arg7[%c0_12, %c0_13] : memref<1x256xf32, #tpu.memory_space<vmem>>, vector<1x256xf32>
    %14 = vector.broadcast %13 : vector<1x256xf32> to vector<16x256xf32>
    %15 = arith.addf %12, %14 : vector<16x256xf32>
    %cst_14 = arith.constant 0.000000e+00 : f32
    %16 = vector.broadcast %cst_14 : f32 to vector<16x256xf32>
    %17 = arith.cmpf ogt, %15, %16 : vector<16x256xf32>
    %cst_15 = arith.constant 1.000000e-01 : f32
    %18 = vector.broadcast %cst_15 : f32 to vector<16x256xf32>
    %19 = arith.mulf %18, %15 : vector<16x256xf32>
    %20 = arith.select %17, %15, %19 : vector<16x256xi1>, vector<16x256xf32>
    %c0_16 = arith.constant 0 : index
    %c0_17 = arith.constant 0 : index
    %21 = vector.load %arg8[%c0_16, %c0_17] : memref<256x256xf32, #tpu.memory_space<vmem>>, vector<256x256xf32>
    %cst_18 = arith.constant dense<0.000000e+00> : vector<16x256xf32>
    %22 = tpu.matmul %20, %21, %cst_18 {dimension_numbers = #tpu.dot_dimension_numbers<[1], [0], [0], [1], [0, 0, 1, 1], [], []>} : vector<16x256xf32>, vector<256x256xf32>, vector<16x256xf32> -> vector<16x256xf32>
    %c0_19 = arith.constant 0 : index
    %c0_20 = arith.constant 0 : index
    %23 = vector.load %arg9[%c0_19, %c0_20] : memref<1x256xf32, #tpu.memory_space<vmem>>, vector<1x256xf32>
    %24 = vector.broadcast %23 : vector<1x256xf32> to vector<16x256xf32>
    %25 = arith.addf %22, %24 : vector<16x256xf32>
    %cst_21 = arith.constant 0.000000e+00 : f32
    %26 = vector.broadcast %cst_21 : f32 to vector<16x256xf32>
    %27 = arith.cmpf ogt, %25, %26 : vector<16x256xf32>
    %cst_22 = arith.constant 1.000000e-01 : f32
    %28 = vector.broadcast %cst_22 : f32 to vector<16x256xf32>
    %29 = arith.mulf %28, %25 : vector<16x256xf32>
    %30 = arith.select %27, %25, %29 : vector<16x256xi1>, vector<16x256xf32>
    %c0_23 = arith.constant 0 : index
    %c0_24 = arith.constant 0 : index
    %31 = vector.load %arg10[%c0_23, %c0_24] : memref<256x256xf32, #tpu.memory_space<vmem>>, vector<256x256xf32>
    %cst_25 = arith.constant dense<0.000000e+00> : vector<16x256xf32>
    %32 = tpu.matmul %30, %31, %cst_25 {dimension_numbers = #tpu.dot_dimension_numbers<[1], [0], [0], [1], [0, 0, 1, 1], [], []>} : vector<16x256xf32>, vector<256x256xf32>, vector<16x256xf32> -> vector<16x256xf32>
    %c0_26 = arith.constant 0 : index
    %c0_27 = arith.constant 0 : index
    %33 = vector.load %arg11[%c0_26, %c0_27] : memref<1x256xf32, #tpu.memory_space<vmem>>, vector<1x256xf32>
    %34 = vector.broadcast %33 : vector<1x256xf32> to vector<16x256xf32>
    %35 = arith.addf %32, %34 : vector<16x256xf32>
    %cst_28 = arith.constant 0.000000e+00 : f32
    %36 = vector.broadcast %cst_28 : f32 to vector<16x256xf32>
    %37 = arith.cmpf ogt, %35, %36 : vector<16x256xf32>
    %cst_29 = arith.constant 1.000000e-01 : f32
    %38 = vector.broadcast %cst_29 : f32 to vector<16x256xf32>
    %39 = arith.mulf %38, %35 : vector<16x256xf32>
    %40 = arith.select %37, %35, %39 : vector<16x256xi1>, vector<16x256xf32>
    %c0_30 = arith.constant 0 : index
    %c0_31 = arith.constant 0 : index
    %41 = vector.load %arg12[%c0_30, %c0_31] : memref<16x256xf32, #tpu.memory_space<vmem>>, vector<16x256xf32>
    tpu.vector_store %arg12[%c0_30, %c0_31], %40 {strides = array<i32>} : memref<16x256xf32, #tpu.memory_space<vmem>>, vector<16x256xf32>,
    return
  }
  func.func @transform_0(%arg0: i32) -> (i32, i32) {
    %c0_i32 = arith.constant 0 : i32
    %c0_i32_0 = arith.constant 0 : i32
    return %arg0, %c0_i32 : i32, i32
  }
  func.func @transform_1(%arg0: i32) -> (i32, i32) {
    %c0_i32 = arith.constant 0 : i32
    %c0_i32_0 = arith.constant 0 : i32
    return %arg0, %c0_i32 : i32, i32
  }
  func.func @transform_2(%arg0: i32) -> (i32, i32) {
    %c0_i32 = arith.constant 0 : i32
    %c0_i32_0 = arith.constant 0 : i32
    %c0_i32_1 = arith.constant 0 : i32
    return %c0_i32, %c0_i32_0 : i32, i32
  }
  func.func @transform_3(%arg0: i32) -> (i32, i32) {
    %c0_i32 = arith.constant 0 : i32
    %c0_i32_0 = arith.constant 0 : i32
    %c0_i32_1 = arith.constant 0 : i32
    return %c0_i32, %c0_i32_0 : i32, i32
  }
  func.func @transform_4(%arg0: i32) -> (i32, i32) {
    %c0_i32 = arith.constant 0 : i32
    %c0_i32_0 = arith.constant 0 : i32
    %c0_i32_1 = arith.constant 0 : i32
    return %c0_i32, %c0_i32_0 : i32, i32
  }
  func.func @transform_5(%arg0: i32) -> (i32, i32) {
    %c0_i32 = arith.constant 0 : i32
    %c0_i32_0 = arith.constant 0 : i32
    %c0_i32_1 = arith.constant 0 : i32
    return %c0_i32, %c0_i32_0 : i32, i32
  }
  func.func @transform_6(%arg0: i32) -> (i32, i32) {
    %c0_i32 = arith.constant 0 : i32
    %c0_i32_0 = arith.constant 0 : i32
    %c0_i32_1 = arith.constant 0 : i32
    return %c0_i32, %c0_i32_0 : i32, i32
  }
  func.func @transform_7(%arg0: i32) -> (i32, i32) {
    %c0_i32 = arith.constant 0 : i32
    %c0_i32_0 = arith.constant 0 : i32
    %c0_i32_1 = arith.constant 0 : i32
    return %c0_i32, %c0_i32_0 : i32, i32
  }
  func.func @transform_8(%arg0: i32) -> (i32, i32) {
    %c0_i32 = arith.constant 0 : i32
    %c0_i32_0 = arith.constant 0 : i32
    %c0_i32_1 = arith.constant 0 : i32
    return %c0_i32, %c0_i32_0 : i32, i32
  }
  func.func @transform_9(%arg0: i32) -> (i32, i32) {
    %c0_i32 = arith.constant 0 : i32
    %c0_i32_0 = arith.constant 0 : i32
    %c0_i32_1 = arith.constant 0 : i32
    return %c0_i32, %c0_i32_0 : i32, i32
  }
  func.func @transform_10(%arg0: i32) -> (i32, i32) {
    %c0_i32 = arith.constant 0 : i32
    %c0_i32_0 = arith.constant 0 : i32
    %c0_i32_1 = arith.constant 0 : i32
    return %c0_i32, %c0_i32_0 : i32, i32
  }
  func.func @transform_11(%arg0: i32) -> (i32, i32) {
    %c0_i32 = arith.constant 0 : i32
    %c0_i32_0 = arith.constant 0 : i32
    return %arg0, %c0_i32 : i32, i32
  }
}

</mosaic_0001>

<llo_original>
// kernel: prednet_forward.1
$region0: #{prednet_forward.1}
  #allocation0 [shape = 'u32[]', space=smem, size = 0x4, offset = 0x4, fixed_abs, tag = 'smem constant byte address 0x4 - core index']
  #allocation1 [shape = 'u32[144,128]{1,0:T(1,128)}', space=vmem, size = 0x12000, scoped, tag = 'internal scratch']
  %s0 = inlined_call_operand.vmem [shape: f32[16,16], index: 0, kind: input, shape index: {}]
  %s1 = inlined_call_operand.vmem [shape: f32[16,8], index: 1, kind: input, shape index: {}]
  %s2 = inlined_call_operand.hbm [shape: f32[1,16], index: 2, kind: input, shape index: {}]
  %s3 = inlined_call_operand.hbm [shape: f32[1,16], index: 3, kind: input, shape index: {}]
  %s4 = inlined_call_operand.vmem [shape: f32[16,256], index: 4, kind: input, shape index: {}]
  %s5 = inlined_call_operand.hbm [shape: f32[8,256], index: 5, kind: input, shape index: {}]
  %s6 = inlined_call_operand.vmem [shape: f32[1,256], index: 6, kind: input, shape index: {}]
  %s7 = inlined_call_operand.hbm [shape: f32[256,256], index: 7, kind: input, shape index: {}]
  %s8 = inlined_call_operand.vmem [shape: f32[1,256], index: 8, kind: input, shape index: {}]
  %s9 = inlined_call_operand.hbm [shape: f32[256,256], index: 9, kind: input, shape index: {}]
  %s10 = inlined_call_operand.vmem [shape: f32[1,256], index: 10, kind: input, shape index: {}]
  %s11 = inlined_call_operand.hbm [shape: f32[16,256], index: 11, kind: output, shape index: {}]
  %s12 = sld [smem:[#allocation0]]
  $region74: #{prednet_forward.1} parent=0
    _
  %s14 = ssub.s32 1, %s12
  %s15 = scalar_select 0, %s14, %s12
  $region1: #{prednet_forward.1} parent=0
    #allocation2 [shape = 'u8[512]{0}', space=vmem, size = 0x400, scoped, tag = 'input window, operand 2, single buffered']
    #allocation3 [shape = 's32[1]{0}', space=sflag, size = 0x4, scoped, tag = 'scoped memory for prednet_forward.1']
    #allocation4 [shape = 's32[1]{0}', space=sflag, size = 0x4, scoped, tag = 'scoped memory for prednet_forward.1']
    #allocation5 [shape = 'u8[512]{0}', space=vmem, size = 0x400, scoped, tag = 'input window, operand 3, single buffered']
    #allocation6 [shape = 's32[1]{0}', space=sflag, size = 0x4, scoped, tag = 'scoped memory for prednet_forward.1']
    #allocation7 [shape = 'u8[8192]{0}', space=vmem, size = 0x2000, scoped, tag = 'input window, operand 5, single buffered']
    #allocation8 [shape = 'u8[262144]{0}', space=vmem, size = 0x40000, scoped, tag = 'input window, operand 7, single buffered']
    #allocation9 [shape = 's32[1]{0}', space=sflag, size = 0x4, scoped, tag = 'scoped memory for prednet_forward.1']
    #allocation10 [shape = 'u8[262144]{0}', space=vmem, size = 0x40000, scoped, tag = 'input window, operand 9, single buffered']
    #allocation11 [shape = 'u8[16384]{0}', space=vmem, size = 0x4000, scoped, tag = 'output window, operand 0, single buffered']
    %16 = vsyncpa [#allocation3], 0
    %17 = vsyncpa [#allocation6], 0
    %18 = vsyncpa [#allocation9], 0
    %19 = vsyncpa [#allocation4], 0
    // Predicated region
    $region2: #{prednet_forward.1} parent=1 // pred_check
      _
    $region3: #{prednet_forward.1} parent=1 // pred_check_branch
      %21 = sbr.rel (0) target = $region5
    $region4: #{prednet_forward.1} parent=1 // pred_region
      _
    $region5: #{prednet_forward.1} parent=1 // pred_fallthru
      _
    // Predicated region
    $region6: #{prednet_forward.1} parent=1 // pred_check
      _
    $region7: #{prednet_forward.1} parent=1 // pred_check_branch
      %23 = sbr.rel (0) target = $region9
    $region8: #{prednet_forward.1} parent=1 // pred_region
      _
    $region9: #{prednet_forward.1} parent=1 // pred_fallthru
      _
    // Predicated region
    $region10: #{prednet_forward.1} parent=1 // pred_check
      _
    $region11: #{prednet_forward.1} parent=1 // pred_check_branch
      %25 = sbr.rel (0) target = $region13
    $region12: #{prednet_forward.1} parent=1 // pred_region
      %s27 = ssub.s32 16, 16
      %28 = vsyncadd [#allocation3], %s27
      %s30 = sshll.u32 [#allocation2], 4
      %s31 = int_to_ptr.vmem [resolvable:$true] %s30
      %33 = dma.hbm_to_vmem [thread:$0]  %s2, 16, %s31, [#allocation3]
    $region13: #{prednet_forward.1} parent=1 // pred_fallthru
      _
    // Predicated region
    $region14: #{prednet_forward.1} parent=1 // pred_check
      _
    $region15: #{prednet_forward.1} parent=1 // pred_check_branch
      %35 = sbr.rel (0) target = $region17
    $region16: #{prednet_forward.1} parent=1 // pred_region
      %s37 = ssub.s32 16, 16
      %38 = vsyncadd [#allocation6], %s37
      %s40 = sshll.u32 [#allocation5], 4
      %s41 = int_to_ptr.vmem [resolvable:$true] %s40
      %43 = dma.hbm_to_vmem [thread:$0]  %s3, 16, %s41, [#allocation6]
    $region17: #{prednet_forward.1} parent=1 // pred_fallthru
      _
    // Predicated region
    $region18: #{prednet_forward.1} parent=1 // pred_check
      _
    $region19: #{prednet_forward.1} parent=1 // pred_check_branch
      %45 = sbr.rel (0) target = $region21
    $region20: #{prednet_forward.1} parent=1 // pred_region
      _
    $region21: #{prednet_forward.1} parent=1 // pred_fallthru
      _
    // Predicated region
    $region22: #{prednet_forward.1} parent=1 // pred_check
      _
    $region23: #{prednet_forward.1} parent=1 // pred_check_branch
      %47 = sbr.rel (0) target = $region25
    $region24: #{prednet_forward.1} parent=1 // pred_region
      %s49 = ssub.s32 256, 256
      %50 = vsyncadd [#allocation6], %s49
      %s52 = sshll.u32 [#allocation7], 4
      %s53 = int_to_ptr.vmem [resolvable:$true] %s52
      %55 = dma.hbm_to_vmem [thread:$0]  %s5, 256, %s53, [#allocation6]
    $region25: #{prednet_forward.1} parent=1 // pred_fallthru
      _
    // Predicated region
    $region26: #{prednet_forward.1} parent=1 // pred_check
      _
    $region27: #{prednet_forward.1} parent=1 // pred_check_branch
      %57 = sbr.rel (0) target = $region29
    $region28: #{prednet_forward.1} parent=1 // pred_region
      _
    $region29: #{prednet_forward.1} parent=1 // pred_fallthru
      _
    // Predicated region
    $region30: #{prednet_forward.1} parent=1 // pred_check
      _
    $region31: #{prednet_forward.1} parent=1 // pred_check_branch
      %59 = sbr.rel (0) target = $region33
    $region32: #{prednet_forward.1} parent=1 // pred_region
      %s61 = ssub.s32 8192, 8192
      %62 = vsyncadd [#allocation9], %s61
      %s63 = sshll.u32 [#allocation8], 4
      %s64 = int_to_ptr.vmem [resolvable:$true] %s63
      %69 = dma.hbm_to_vmem [thread:$0]  %s7, 8192, %s64, [#allocation9], 256, 256, 16
    $region33: #{prednet_forward.1} parent=1 // pred_fallthru
      _
    // Predicated region
    $region34: #{prednet_forward.1} parent=1 // pred_check
      _
    $region35: #{prednet_forward.1} parent=1 // pred_check_branch
      %71 = sbr.rel (0) target = $region37
    $region36: #{prednet_forward.1} parent=1 // pred_region
      _
    $region37: #{prednet_forward.1} parent=1 // pred_fallthru
      _
    // Predicated region
    $region38: #{prednet_forward.1} parent=1 // pred_check
      _
    $region39: #{prednet_forward.1} parent=1 // pred_check_branch
      %73 = sbr.rel (0) target = $region41
    $region40: #{prednet_forward.1} parent=1 // pred_region
      %s75 = ssub.s32 8192, 8192
      %76 = vsyncadd [#allocation9], %s75
      %s77 = sshll.u32 [#allocation10], 4
      %s78 = int_to_ptr.vmem [resolvable:$true] %s77
      %83 = dma.hbm_to_vmem [thread:$0]  %s9, 8192, %s78, [#allocation9], 256, 256, 16
    $region41: #{prednet_forward.1} parent=1 // pred_fallthru
      _
    // Predicated region
    $region42: #{prednet_forward.1} parent=1 // pred_check
      _
    $region43: #{prednet_forward.1} parent=1 // pred_check_branch
      %85 = sbr.rel (0) target = $region45
    $region44: #{prednet_forward.1} parent=1 // pred_region
      _
    $region45: #{prednet_forward.1} parent=1 // pred_fallthru
      _
    // Predicated region
    $region46: #{prednet_forward.1} parent=1 // pred_check
      _
    $region47: #{prednet_forward.1} parent=1 // pred_check_branch
      %87 = sbr.rel (0) target = $region49
    $region48: #{prednet_forward.1} parent=1 // pred_region
      %88 = dma.done [#allocation3], 16
    $region49: #{prednet_forward.1} parent=1 // pred_fallthru
      _
    // Predicated region
    $region50: #{prednet_forward.1} parent=1 // pred_check
      _
    $region51: #{prednet_forward.1} parent=1 // pred_check_branch
      %90 = sbr.rel (0) target = $region53
    $region52: #{prednet_forward.1} parent=1 // pred_region
      %91 = dma.done [#allocation6], 16
    $region53: #{prednet_forward.1} parent=1 // pred_fallthru
      _
    // Predicated region
    $region54: #{prednet_forward.1} parent=1 // pred_check
      _
    $region55: #{prednet_forward.1} parent=1 // pred_check_branch
      %93 = sbr.rel (0) target = $region57
    $region56: #{prednet_forward.1} parent=1 // pred_region
      %94 = dma.done [#allocation6], 256
    $region57: #{prednet_forward.1} parent=1 // pred_fallthru
      _
    // Predicated region
    $region58: #{prednet_forward.1} parent=1 // pred_check
      _
    $region59: #{prednet_forward.1} parent=1 // pred_check_branch
      %96 = sbr.rel (0) target = $region61
    $region60: #{prednet_forward.1} parent=1 // pred_region
      %97 = dma.done [#allocation9], 8192
    $region61: #{prednet_forward.1} parent=1 // pred_fallthru
      _
    // Predicated region
    $region62: #{prednet_forward.1} parent=1 // pred_check
      _
    $region63: #{prednet_forward.1} parent=1 // pred_check_branch
      %99 = sbr.rel (0) target = $region65
    $region64: #{prednet_forward.1} parent=1 // pred_region
      %100 = dma.done [#allocation9], 8192
    $region65: #{prednet_forward.1} parent=1 // pred_fallthru
      _
    %v101 = vld [vmem:[%s0] sm:$0xff]
    %v102 = vld [vmem:[%s0 + $0x8] sm:$0xff]
    %v103 = vld [vmem:[#allocation2] sm:$0x1]
    %v105 = vlaneseq
    %v106 = vshrl.u32 %v105, 7
    %v107 = vsub.s32 0, %v106
    %v108 = vrot.slane %v103, %v107
    %v110 = vmax.f32 %v101, %v108
    %v111 = vmax.f32 %v102, %v108
    %v112 = vld [vmem:[#allocation5] sm:$0x1]
    %v114 = vlaneseq
    %v115 = vshrl.u32 %v114, 7
    %v116 = vsub.s32 0, %v115
    %v117 = vrot.slane %v112, %v116
    %v119 = vmin.f32 %v110, %v117
    %v120 = vmin.f32 %v111, %v117
    %v121 = vld [vmem:[%s4] sm:$0xff]
    %v122 = vld [vmem:[%s4 + $0x8] sm:$0xff]
    %v123 = vld [vmem:[%s4 + $0x10] sm:$0xff]
    %v124 = vld [vmem:[%s4 + $0x18] sm:$0xff]
    %v125 = vld [vmem:[%s1] sm:$0xff]
    %v126 = vld [vmem:[%s1 + $0x8] sm:$0xff]
    %v127 = vld [vmem:[#allocation7] sm:$0xff]
    %v128 = vld [vmem:[#allocation7 + $0x8] sm:$0xff]
    %vm129 = vcmask 64512
    %v131 = vsel %vm129, %v125, 0
    %v134 = vsel %vm129, %v126, 0
    %136 = vmatprep.subr.mxu0 %v128
    %137 = vmatpush1.msra.mxu0 %v127
    %138 = vmatprep.subr.mxu0 0.0
    %139 = vmatpush1.msra.mxu0 0.0
    %140 = vmatprep.subr.mxu0 0.0
    %141 = vmatpush1.msra.mxu0 0.0
    %142 = vmatprep.subr.mxu0 0.0
    %143 = vmatpush1.msra.mxu0 0.0
    %144 = vmatprep.subr.mxu0 0.0
    %145 = vmatpush1.msra.mxu0 0.0
    %146 = vmatprep.subr.mxu0 0.0
    %147 = vmatpush1.msra.mxu0 0.0
    %148 = vmatprep.subr.mxu0 0.0
    %149 = vmatpush1.msra.mxu0 0.0
    %150 = vmatprep.subr.mxu0 0.0
    %151 = vmatpush1.msra.mxu0 0.0
    %152 = vmatprep.subr.mxu0 0.0
    %153 = vmatpush1.msra.mxu0 0.0
    %154 = vmatprep.subr.mxu0 0.0
    %155 = vmatpush1.msra.mxu0 0.0
    %156 = vmatprep.subr.mxu0 0.0
    %157 = vmatpush1.msra.mxu0 0.0
    %158 = vmatprep.subr.mxu0 0.0
    %159 = vmatpush1.msra.mxu0 0.0
    %160 = vmatprep.subr.mxu0 0.0
    %161 = vmatpush1.msra.mxu0 0.0
    %162 = vmatprep.subr.mxu0 0.0
    %163 = vmatpush1.msra.mxu0 0.0
    %164 = vmatprep.subr.mxu0 0.0
    %165 = vmatpush1.msra.mxu0 0.0
    %166 = vmatprep.subr.mxu0 0.0
    %167 = vmatpush1.msra.mxu0 0.0
    %168 = vmatprep.subr.mxu0 0.0
    %169 = vmatpush1.msra.mxu0 0.0
    %170 = vmatprep.subr.mxu0 0.0
    %171 = vmatpush1.msra.mxu0 0.0
    %172 = vmatprep.subr.mxu0 0.0
    %173 = vmatpush1.msra.mxu0 0.0
    %174 = vmatprep.subr.mxu0 0.0
    %175 = vmatpush1.msra.mxu0 0.0
    %176 = vmatprep.subr.mxu0 0.0
    %177 = vmatpush1.msra.mxu0 0.0
    %178 = vmatprep.subr.mxu0 0.0
    %179 = vmatpush1.msra.mxu0 0.0
    %180 = vmatprep.subr.mxu0 0.0
    %181 = vmatpush1.msra.mxu0 0.0
    %182 = vmatprep.subr.mxu0 0.0
    %183 = vmatpush1.msra.mxu0 0.0
    %184 = vmatprep.subr.mxu0 0.0
    %185 = vmatpush1.msra.mxu0 0.0
    %186 = vmatprep.subr.mxu0 0.0
    %187 = vmatpush1.msra.mxu0 0.0
    %188 = vmatprep.subr.mxu0 0.0
    %189 = vmatpush1.msra.mxu0 0.0
    %190 = vmatprep.subr.mxu0 0.0
    %191 = vmatpush1.msra.mxu0 0.0
    %192 = vmatprep.subr.mxu0 0.0
    %193 = vmatpush1.msra.mxu0 0.0
    %194 = vmatprep.subr.mxu0 0.0
    %195 = vmatpush1.msra.mxu0 0.0
    %196 = vmatprep.subr.mxu0 0.0
    %197 = vmatpush1.msra.mxu0 0.0
    %198 = vmatprep.subr.mxu0 0.0
    %199 = vmatpush1.msra.mxu0 0.0
    %200 = vmatprep.mubr.f32.mxu0 0.0
    %201 = vmatmul.mubr.f32.gmra.mrb[0].mxu0 %v131
    %v202 = vpop.f32.mrb[0].mxu0
    %v203 = vadd.f32 0.0, %v202
    %v204 = vpop.f32.mrb[0].mxu0
    %v205 = vadd.f32 0.0, %v204
    %206 = vmatprep.mubr.f32.mxu0 0.0
    %207 = vmatmul.mubr.f32.gmra.mrb[0].mxu0 %v134
    %v208 = vpop.f32.mrb[0].mxu0
    %v209 = vadd.f32 0.0, %v208
    %v210 = vpop.f32.mrb[0].mxu0
    %v211 = vadd.f32 0.0, %v210
    %212 = vdwg.mxu0
    %vm213 = vcmask 130048
    %v215 = vsel %vm213, %v119, 0
    %v218 = vsel %vm213, %v120, 0
    %220 = vmatprep.subr.mxu0 %v122
    %221 = vmatpush1.msra.mxu0 %v121
    %222 = vmatprep.subr.mxu0 %v124
    %223 = vmatpush1.msra.mxu0 %v123
    %224 = vmatprep.subr.mxu0 0.0
    %225 = vmatpush1.msra.mxu0 0.0
    %226 = vmatprep.subr.mxu0 0.0
    %227 = vmatpush1.msra.mxu0 0.0
    %228 = vmatprep.subr.mxu0 0.0
    %229 = vmatpush1.msra.mxu0 0.0
    %230 = vmatprep.subr.mxu0 0.0
    %231 = vmatpush1.msra.mxu0 0.0
    %232 = vmatprep.subr.mxu0 0.0
    %233 = vmatpush1.msra.mxu0 0.0
    %234 = vmatprep.subr.mxu0 0.0
    %235 = vmatpush1.msra.mxu0 0.0
    %236 = vmatprep.subr.mxu0 0.0
    %237 = vmatpush1.msra.mxu0 0.0
    %238 = vmatprep.subr.mxu0 0.0
    %239 = vmatpush1.msra.mxu0 0.0
    %240 = vmatprep.subr.mxu0 0.0
    %241 = vmatpush1.msra.mxu0 0.0
    %242 = vmatprep.subr.mxu0 0.0
    %243 = vmatpush1.msra.mxu0 0.0
    %244 = vmatprep.subr.mxu0 0.0
    %245 = vmatpush1.msra.mxu0 0.0
    %246 = vmatprep.subr.mxu0 0.0
    %247 = vmatpush1.msra.mxu0 0.0
    %248 = vmatprep.subr.mxu0 0.0
    %249 = vmatpush1.msra.mxu0 0.0
    %250 = vmatprep.subr.mxu0 0.0
    %251 = vmatpush1.msra.mxu0 0.0
    %252 = vmatprep.subr.mxu0 0.0
    %253 = vmatpush1.msra.mxu0 0.0
    %254 = vmatprep.subr.mxu0 0.0
    %255 = vmatpush1.msra.mxu0 0.0
    %256 = vmatprep.subr.mxu0 0.0
    %257 = vmatpush1.msra.mxu0 0.0
    %258 = vmatprep.subr.mxu0 0.0
    %259 = vmatpush1.msra.mxu0 0.0
    %260 = vmatprep.subr.mxu0 0.0
    %261 = vmatpush1.msra.mxu0 0.0
    %262 = vmatprep.subr.mxu0 0.0
    %263 = vmatpush1.msra.mxu0 0.0
    %264 = vmatprep.subr.mxu0 0.0
    %265 = vmatpush1.msra.mxu0 0.0
    %266 = vmatprep.subr.mxu0 0.0
    %267 = vmatpush1.msra.mxu0 0.0
    %268 = vmatprep.subr.mxu0 0.0
    %269 = vmatpush1.msra.mxu0 0.0
    %270 = vmatprep.subr.mxu0 0.0
    %271 = vmatpush1.msra.mxu0 0.0
    %272 = vmatprep.subr.mxu0 0.0
    %273 = vmatpush1.msra.mxu0 0.0
    %274 = vmatprep.subr.mxu0 0.0
    %275 = vmatpush1.msra.mxu0 0.0
    %276 = vmatprep.subr.mxu0 0.0
    %277 = vmatpush1.msra.mxu0 0.0
    %278 = vmatprep.subr.mxu0 0.0
    %279 = vmatpush1.msra.mxu0 0.0
    %280 = vmatprep.subr.mxu0 0.0
    %281 = vmatpush1.msra.mxu0 0.0
    %282 = vmatprep.subr.mxu0 0.0
    %283 = vmatpush1.msra.mxu0 0.0
    %284 = vmatprep.mubr.f32.mxu0 0.0
    %285 = vmatmul.mubr.f32.gmra.mrb[0].mxu0 %v215
    %v286 = vpop.f32.mrb[0].mxu0
    %v287 = vadd.f32 %v203, %v286
    %v288 = vpop.f32.mrb[0].mxu0
    %v289 = vadd.f32 %v205, %v288
    %290 = vmatprep.mubr.f32.mxu0 0.0
    %291 = vmatmul.mubr.f32.gmra.mrb[0].mxu0 %v218
    %v292 = vpop.f32.mrb[0].mxu0
    %v293 = vadd.f32 %v209, %v292
    %v294 = vpop.f32.mrb[0].mxu0
    %v295 = vadd.f32 %v211, %v294
    %296 = vdwg.mxu0
    %v297 = vld [vmem:[%s6] sm:$0x3]
    %v299 = vlaneseq
    %v300 = vshrl.u32 %v299, 7
    %v301 = vsub.s32 0, %v300
    %v302 = vrot.slane %v297, %v301
    %v303 = vlaneseq
    %v304 = vshrl.u32 %v303, 7
    %v305 = vsub.s32 1, %v304
    %v306 = vrot.slane %v297, %v305
    %v309 = vadd.f32 %v287, %v302
    %v310 = vadd.f32 %v289, %v306
    %v311 = vadd.f32 %v293, %v302
    %v312 = vadd.f32 %v295, %v306
    %vm313 = vcmp.gt.f32.partialorder %v309, 0.0
    %vm314 = vcmp.gt.f32.partialorder %v310, 0.0
    %vm315 = vcmp.gt.f32.partialorder %v311, 0.0
    %vm316 = vcmp.gt.f32.partialorder %v312, 0.0
    %v317 = vmul.f32 %v309, 0.1
    %v318 = vmul.f32 %v310, 0.1
    %v319 = vmul.f32 %v311, 0.1
    %v320 = vmul.f32 %v312, 0.1
    %v321 = vsel %vm313, %v309, %v317
    %v322 = vsel %vm314, %v310, %v318
    %v323 = vsel %vm315, %v311, %v319
    %v324 = vsel %vm316, %v312, %v320
    %v325 = vld [vmem:[#allocation8] sm:$0xff]
    %v326 = vld [vmem:[#allocation8 + $0x8] sm:$0xff]
    %v327 = vld [vmem:[#allocation8 + $0x10] sm:$0xff]
    %v328 = vld [vmem:[#allocation8 + $0x18] sm:$0xff]
    %v329 = vld [vmem:[#allocation8 + $0x20] sm:$0xff]
    %v330 = vld [vmem:[#allocation8 + $0x28] sm:$0xff]
    %v331 = vld [vmem:[#allocation8 + $0x30] sm:$0xff]
    %v332 = vld [vmem:[#allocation8 + $0x38] sm:$0xff]
    %v333 = vld [vmem:[#allocation8 + $0x40] sm:$0xff]
    %v334 = vld [vmem:[#allocation8 + $0x48] sm:$0xff]
    %v335 = vld [vmem:[#allocation8 + $0x50] sm:$0xff]
    %v336 = vld [vmem:[#allocation8 + $0x58] sm:$0xff]
    %v337 = vld [vmem:[#allocation8 + $0x60] sm:$0xff]
    %v338 = vld [vmem:[#allocation8 + $0x68] sm:$0xff]
    %v339 = vld [vmem:[#allocation8 + $0x70] sm:$0xff]
    %v340 = vld [vmem:[#allocation8 + $0x78] sm:$0xff]
    %v341 = vld [vmem:[#allocation8 + $0x80] sm:$0xff]
    %v342 = vld [vmem:[#allocation8 + $0x88] sm:$0xff]
    %v343 = vld [vmem:[#allocation8 + $0x90] sm:$0xff]
    %v344 = vld [vmem:[#allocation8 + $0x98] sm:$0xff]
    %v345 = vld [vmem:[#allocation8 + $0xa0] sm:$0xff]
    %v346 = vld [vmem:[#allocation8 + $0xa8] sm:$0xff]
    %v347 = vld [vmem:[#allocation8 + $0xb0] sm:$0xff]
    %v348 = vld [vmem:[#allocation8 + $0xb8] sm:$0xff]
    %v349 = vld [vmem:[#allocation8 + $0xc0] sm:$0xff]
    %v350 = vld [vmem:[#allocation8 + $0xc8] sm:$0xff]
    %v351 = vld [vmem:[#allocation8 + $0xd0] sm:$0xff]
    %v352 = vld [vmem:[#allocation8 + $0xd8] sm:$0xff]
    %v353 = vld [vmem:[#allocation8 + $0xe0] sm:$0xff]
    %v354 = vld [vmem:[#allocation8 + $0xe8] sm:$0xff]
    %v355 = vld [vmem:[#allocation8 + $0xf0] sm:$0xff]
    %v356 = vld [vmem:[#allocation8 + $0xf8] sm:$0xff]
    %v357 = vld [vmem:[#allocation8 + $0x100] sm:$0xff]
    %v358 = vld [vmem:[#allocation8 + $0x108] sm:$0xff]
    %v359 = vld [vmem:[#allocation8 + $0x110] sm:$0xff]
    %v360 = vld [vmem:[#allocation8 + $0x118] sm:$0xff]
    %v361 = vld [vmem:[#allocation8 + $0x120] sm:$0xff]
    %v362 = vld [vmem:[#allocation8 + $0x128] sm:$0xff]
    %v363 = vld [vmem:[#allocation8 + $0x130] sm:$0xff]
    %v364 = vld [vmem:[#allocation8 + $0x138] sm:$0xff]
    %v365 = vld [vmem:[#allocation8 + $0x140] sm:$0xff]
    %v366 = vld [vmem:[#allocation8 + $0x148] sm:$0xff]
    %v367 = vld [vmem:[#allocation8 + $0x150] sm:$0xff]
    %v368 = vld [vmem:[#allocation8 + $0x158] sm:$0xff]
    %v369 = vld [vmem:[#allocation8 + $0x160] sm:$0xff]
    %v370 = vld [vmem:[#allocation8 + $0x168] sm:$0xff]
    %v371 = vld [vmem:[#allocation8 + $0x170] sm:$0xff]
    %v372 = vld [vmem:[#allocation8 + $0x178] sm:$0xff]
    %v373 = vld [vmem:[#allocation8 + $0x180] sm:$0xff]
    %v374 = vld [vmem:[#allocation8 + $0x188] sm:$0xff]
    %v375 = vld [vmem:[#allocation8 + $0x190] sm:$0xff]
    %v376 = vld [vmem:[#allocation8 + $0x198] sm:$0xff]
    %v377 = vld [vmem:[#allocation8 + $0x1a0] sm:$0xff]
    %v378 = vld [vmem:[#allocation8 + $0x1a8] sm:$0xff]
    %v379 = vld [vmem:[#allocation8 + $0x1b0] sm:$0xff]
    %v380 = vld [vmem:[#allocation8 + $0x1b8] sm:$0xff]
    %v381 = vld [vmem:[#allocation8 + $0x1c0] sm:$0xff]
    %v382 = vld [vmem:[#allocation8 + $0x1c8] sm:$0xff]
    %v383 = vld [vmem:[#allocation8 + $0x1d0] sm:$0xff]
    %v384 = vld [vmem:[#allocation8 + $0x1d8] sm:$0xff]
    %v385 = vld [vmem:[#allocation8 + $0x1e0] sm:$0xff]
    %v386 = vld [vmem:[#allocation8 + $0x1e8] sm:$0xff]
    %v387 = vld [vmem:[#allocation8 + $0x1f0] sm:$0xff]
    %v388 = vld [vmem:[#allocation8 + $0x1f8] sm:$0xff]
    %v389 = vld [vmem:[%s8] sm:$0x3]
    %v391 = vlaneseq
    %v392 = vshrl.u32 %v391, 7
    %v393 = vsub.s32 0, %v392
    %v394 = vrot.slane %v389, %v393
    %v395 = vlaneseq
    %v396 = vshrl.u32 %v395, 7
    %v397 = vsub.s32 1, %v396
    %v398 = vrot.slane %v389, %v397
    %401 = vmatprep.subr.mxu0 %v326
    %402 = vmatpush1.msra.mxu0 %v325
    %403 = vmatprep.subr.mxu0 %v328
    %404 = vmatpush1.msra.mxu0 %v327
    %405 = vmatprep.subr.mxu0 %v330
    %406 = vmatpush1.msra.mxu0 %v329
    %407 = vmatprep.subr.mxu0 %v332
    %408 = vmatpush1.msra.mxu0 %v331
    %409 = vmatprep.subr.mxu0 %v334
    %410 = vmatpush1.msra.mxu0 %v333
    %411 = vmatprep.subr.mxu0 %v336
    %412 = vmatpush1.msra.mxu0 %v335
    %413 = vmatprep.subr.mxu0 %v338
    %414 = vmatpush1.msra.mxu0 %v337
    %415 = vmatprep.subr.mxu0 %v340
    %416 = vmatpush1.msra.mxu0 %v339
    %417 = vmatprep.subr.mxu0 %v342
    %418 = vmatpush1.msra.mxu0 %v341
    %419 = vmatprep.subr.mxu0 %v344
    %420 = vmatpush1.msra.mxu0 %v343
    %421 = vmatprep.subr.mxu0 %v346
    %422 = vmatpush1.msra.mxu0 %v345
    %423 = vmatprep.subr.mxu0 %v348
    %424 = vmatpush1.msra.mxu0 %v347
    %425 = vmatprep.subr.mxu0 %v350
    %426 = vmatpush1.msra.mxu0 %v349
    %427 = vmatprep.subr.mxu0 %v352
    %428 = vmatpush1.msra.mxu0 %v351
    %429 = vmatprep.subr.mxu0 %v354
    %430 = vmatpush1.msra.mxu0 %v353
    %431 = vmatprep.subr.mxu0 %v356
    %432 = vmatpush1.msra.mxu0 %v355
    %433 = vmatprep.subr.mxu0 %v358
    %434 = vmatpush1.msra.mxu0 %v357
    %435 = vmatprep.subr.mxu0 %v360
    %436 = vmatpush1.msra.mxu0 %v359
    %437 = vmatprep.subr.mxu0 %v362
    %438 = vmatpush1.msra.mxu0 %v361
    %439 = vmatprep.subr.mxu0 %v364
    %440 = vmatpush1.msra.mxu0 %v363
    %441 = vmatprep.subr.mxu0 %v366
    %442 = vmatpush1.msra.mxu0 %v365
    %443 = vmatprep.subr.mxu0 %v368
    %444 = vmatpush1.msra.mxu0 %v367
    %445 = vmatprep.subr.mxu0 %v370
    %446 = vmatpush1.msra.mxu0 %v369
    %447 = vmatprep.subr.mxu0 %v372
    %448 = vmatpush1.msra.mxu0 %v371
    %449 = vmatprep.subr.mxu0 %v374
    %450 = vmatpush1.msra.mxu0 %v373
    %451 = vmatprep.subr.mxu0 %v376
    %452 = vmatpush1.msra.mxu0 %v375
    %453 = vmatprep.subr.mxu0 %v378
    %454 = vmatpush1.msra.mxu0 %v377
    %455 = vmatprep.subr.mxu0 %v380
    %456 = vmatpush1.msra.mxu0 %v379
    %457 = vmatprep.subr.mxu0 %v382
    %458 = vmatpush1.msra.mxu0 %v381
    %459 = vmatprep.subr.mxu0 %v384
    %460 = vmatpush1.msra.mxu0 %v383
    %461 = vmatprep.subr.mxu0 %v386
    %462 = vmatpush1.msra.mxu0 %v385
    %463 = vmatprep.subr.mxu0 %v388
    %464 = vmatpush1.msra.mxu0 %v387
    %465 = vmatprep.mubr.f32.mxu0 %v322
    %466 = vmatmul.mubr.f32.gmra.mrb[0].mxu0 %v321
    %v467 = vpop.f32.mrb[0].mxu0
    %v468 = vadd.f32 %v394, %v467
    %v469 = vpop.f32.mrb[0].mxu0
    %v470 = vadd.f32 %v398, %v469
    %471 = vmatprep.mubr.f32.mxu0 %v324
    %472 = vmatmul.mubr.f32.gmra.mrb[0].mxu0 %v323
    %v473 = vpop.f32.mrb[0].mxu0
    %v474 = vadd.f32 %v394, %v473
    %v475 = vpop.f32.mrb[0].mxu0
    %v476 = vadd.f32 %v398, %v475
    %477 = vdwg.mxu0
    %vm478 = vcmp.gt.f32.partialorder %v468, 0.0
    %vm479 = vcmp.gt.f32.partialorder %v470, 0.0
    %vm480 = vcmp.gt.f32.partialorder %v474, 0.0
    %vm481 = vcmp.gt.f32.partialorder %v476, 0.0
    %v482 = vmul.f32 %v468, 0.1
    %v483 = vmul.f32 %v470, 0.1
    %v484 = vmul.f32 %v474, 0.1
    %v485 = vmul.f32 %v476, 0.1
    %v486 = vsel %vm478, %v468, %v482
    %v487 = vsel %vm479, %v470, %v483
    %v488 = vsel %vm480, %v474, %v484
    %v489 = vsel %vm481, %v476, %v485
    %v490 = vld [vmem:[#allocation10] sm:$0xff]
    %v491 = vld [vmem:[#allocation10 + $0x8] sm:$0xff]
    %v492 = vld [vmem:[#allocation10 + $0x10] sm:$0xff]
    %v493 = vld [vmem:[#allocation10 + $0x18] sm:$0xff]
    %v494 = vld [vmem:[#allocation10 + $0x20] sm:$0xff]
    %v495 = vld [vmem:[#allocation10 + $0x28] sm:$0xff]
    %v496 = vld [vmem:[#allocation10 + $0x30] sm:$0xff]
    %v497 = vld [vmem:[#allocation10 + $0x38] sm:$0xff]
    %v498 = vld [vmem:[#allocation10 + $0x40] sm:$0xff]
    %v499 = vld [vmem:[#allocation10 + $0x48] sm:$0xff]
    %v500 = vld [vmem:[#allocation10 + $0x50] sm:$0xff]
    %v501 = vld [vmem:[#allocation10 + $0x58] sm:$0xff]
    %v502 = vld [vmem:[#allocation10 + $0x60] sm:$0xff]
    %v503 = vld [vmem:[#allocation10 + $0x68] sm:$0xff]
    %v504 = vld [vmem:[#allocation10 + $0x70] sm:$0xff]
    %v505 = vld [vmem:[#allocation10 + $0x78] sm:$0xff]
    %v506 = vld [vmem:[#allocation10 + $0x80] sm:$0xff]
    %v507 = vld [vmem:[#allocation10 + $0x88] sm:$0xff]
    %v508 = vld [vmem:[#allocation10 + $0x90] sm:$0xff]
    %v509 = vld [vmem:[#allocation10 + $0x98] sm:$0xff]
    %v510 = vld [vmem:[#allocation10 + $0xa0] sm:$0xff]
    %v511 = vld [vmem:[#allocation10 + $0xa8] sm:$0xff]
    %v512 = vld [vmem:[#allocation10 + $0xb0] sm:$0xff]
    %v513 = vld [vmem:[#allocation10 + $0xb8] sm:$0xff]
    %v514 = vld [vmem:[#allocation10 + $0xc0] sm:$0xff]
    %v515 = vld [vmem:[#allocation10 + $0xc8] sm:$0xff]
    %v516 = vld [vmem:[#allocation10 + $0xd0] sm:$0xff]
    %v517 = vld [vmem:[#allocation10 + $0xd8] sm:$0xff]
    %v518 = vld [vmem:[#allocation10 + $0xe0] sm:$0xff]
    %v519 = vld [vmem:[#allocation10 + $0xe8] sm:$0xff]
    %v520 = vld [vmem:[#allocation10 + $0xf0] sm:$0xff]
    %v521 = vld [vmem:[#allocation10 + $0xf8] sm:$0xff]
    %v522 = vld [vmem:[#allocation10 + $0x100] sm:$0xff]
    %v523 = vld [vmem:[#allocation10 + $0x108] sm:$0xff]
    %v524 = vld [vmem:[#allocation10 + $0x110] sm:$0xff]
    %v525 = vld [vmem:[#allocation10 + $0x118] sm:$0xff]
    %v526 = vld [vmem:[#allocation10 + $0x120] sm:$0xff]
    %v527 = vld [vmem:[#allocation10 + $0x128] sm:$0xff]
    %v528 = vld [vmem:[#allocation10 + $0x130] sm:$0xff]
    %v529 = vld [vmem:[#allocation10 + $0x138] sm:$0xff]
    %v530 = vld [vmem:[#allocation10 + $0x140] sm:$0xff]
    %v531 = vld [vmem:[#allocation10 + $0x148] sm:$0xff]
    %v532 = vld [vmem:[#allocation10 + $0x150] sm:$0xff]
    %v533 = vld [vmem:[#allocation10 + $0x158] sm:$0xff]
    %v534 = vld [vmem:[#allocation10 + $0x160] sm:$0xff]
    %v535 = vld [vmem:[#allocation10 + $0x168] sm:$0xff]
    %v536 = vld [vmem:[#allocation10 + $0x170] sm:$0xff]
    %v537 = vld [vmem:[#allocation10 + $0x178] sm:$0xff]
    %v538 = vld [vmem:[#allocation10 + $0x180] sm:$0xff]
    %v539 = vld [vmem:[#allocation10 + $0x188] sm:$0xff]
    %v540 = vld [vmem:[#allocation10 + $0x190] sm:$0xff]
    %v541 = vld [vmem:[#allocation10 + $0x198] sm:$0xff]
    %v542 = vld [vmem:[#allocation10 + $0x1a0] sm:$0xff]
    %v543 = vld [vmem:[#allocation10 + $0x1a8] sm:$0xff]
    %v544 = vld [vmem:[#allocation10 + $0x1b0] sm:$0xff]
    %v545 = vld [vmem:[#allocation10 + $0x1b8] sm:$0xff]
    %v546 = vld [vmem:[#allocation10 + $0x1c0] sm:$0xff]
    %v547 = vld [vmem:[#allocation10 + $0x1c8] sm:$0xff]
    %v548 = vld [vmem:[#allocation10 + $0x1d0] sm:$0xff]
    %v549 = vld [vmem:[#allocation10 + $0x1d8] sm:$0xff]
    %v550 = vld [vmem:[#allocation10 + $0x1e0] sm:$0xff]
    %v551 = vld [vmem:[#allocation10 + $0x1e8] sm:$0xff]
    %v552 = vld [vmem:[#allocation10 + $0x1f0] sm:$0xff]
    %v553 = vld [vmem:[#allocation10 + $0x1f8] sm:$0xff]
    %v554 = vld [vmem:[%s10] sm:$0x3]
    %v556 = vlaneseq
    %v557 = vshrl.u32 %v556, 7
    %v558 = vsub.s32 0, %v557
    %v559 = vrot.slane %v554, %v558
    %v560 = vlaneseq
    %v561 = vshrl.u32 %v560, 7
    %v562 = vsub.s32 1, %v561
    %v563 = vrot.slane %v554, %v562
    %566 = vmatprep.subr.mxu0 %v491
    %567 = vmatpush1.msra.mxu0 %v490
    %568 = vmatprep.subr.mxu0 %v493
    %569 = vmatpush1.msra.mxu0 %v492
    %570 = vmatprep.subr.mxu0 %v495
    %571 = vmatpush1.msra.mxu0 %v494
    %572 = vmatprep.subr.mxu0 %v497
    %573 = vmatpush1.msra.mxu0 %v496
    %574 = vmatprep.subr.mxu0 %v499
    %575 = vmatpush1.msra.mxu0 %v498
    %576 = vmatprep.subr.mxu0 %v501
    %577 = vmatpush1.msra.mxu0 %v500
    %578 = vmatprep.subr.mxu0 %v503
    %579 = vmatpush1.msra.mxu0 %v502
    %580 = vmatprep.subr.mxu0 %v505
    %581 = vmatpush1.msra.mxu0 %v504
    %582 = vmatprep.subr.mxu0 %v507
    %583 = vmatpush1.msra.mxu0 %v506
    %584 = vmatprep.subr.mxu0 %v509
    %585 = vmatpush1.msra.mxu0 %v508
    %586 = vmatprep.subr.mxu0 %v511
    %587 = vmatpush1.msra.mxu0 %v510
    %588 = vmatprep.subr.mxu0 %v513
    %589 = vmatpush1.msra.mxu0 %v512
    %590 = vmatprep.subr.mxu0 %v515
    %591 = vmatpush1.msra.mxu0 %v514
    %592 = vmatprep.subr.mxu0 %v517
    %593 = vmatpush1.msra.mxu0 %v516
    %594 = vmatprep.subr.mxu0 %v519
    %595 = vmatpush1.msra.mxu0 %v518
    %596 = vmatprep.subr.mxu0 %v521
    %597 = vmatpush1.msra.mxu0 %v520
    %598 = vmatprep.subr.mxu0 %v523
    %599 = vmatpush1.msra.mxu0 %v522
    %600 = vmatprep.subr.mxu0 %v525
    %601 = vmatpush1.msra.mxu0 %v524
    %602 = vmatprep.subr.mxu0 %v527
    %603 = vmatpush1.msra.mxu0 %v526
    %604 = vmatprep.subr.mxu0 %v529
    %605 = vmatpush1.msra.mxu0 %v528
    %606 = vmatprep.subr.mxu0 %v531
    %607 = vmatpush1.msra.mxu0 %v530
    %608 = vmatprep.subr.mxu0 %v533
    %609 = vmatpush1.msra.mxu0 %v532
    %610 = vmatprep.subr.mxu0 %v535
    %611 = vmatpush1.msra.mxu0 %v534
    %612 = vmatprep.subr.mxu0 %v537
    %613 = vmatpush1.msra.mxu0 %v536
    %614 = vmatprep.subr.mxu0 %v539
    %615 = vmatpush1.msra.mxu0 %v538
    %616 = vmatprep.subr.mxu0 %v541
    %617 = vmatpush1.msra.mxu0 %v540
    %618 = vmatprep.subr.mxu0 %v543
    %619 = vmatpush1.msra.mxu0 %v542
    %620 = vmatprep.subr.mxu0 %v545
    %621 = vmatpush1.msra.mxu0 %v544
    %622 = vmatprep.subr.mxu0 %v547
    %623 = vmatpush1.msra.mxu0 %v546
    %624 = vmatprep.subr.mxu0 %v549
    %625 = vmatpush1.msra.mxu0 %v548
    %626 = vmatprep.subr.mxu0 %v551
    %627 = vmatpush1.msra.mxu0 %v550
    %628 = vmatprep.subr.mxu0 %v553
    %629 = vmatpush1.msra.mxu0 %v552
    %630 = vmatprep.mubr.f32.mxu0 %v487
    %631 = vmatmul.mubr.f32.gmra.mrb[0].mxu0 %v486
    %v632 = vpop.f32.mrb[0].mxu0
    %v633 = vadd.f32 %v559, %v632
    %v634 = vpop.f32.mrb[0].mxu0
    %v635 = vadd.f32 %v563, %v634
    %636 = vmatprep.mubr.f32.mxu0 %v489
    %637 = vmatmul.mubr.f32.gmra.mrb[0].mxu0 %v488
    %v638 = vpop.f32.mrb[0].mxu0
    %v639 = vadd.f32 %v559, %v638
    %v640 = vpop.f32.mrb[0].mxu0
    %v641 = vadd.f32 %v563, %v640
    %642 = vdwg.mxu0
    %vm643 = vcmp.gt.f32.partialorder %v633, 0.0
    %vm644 = vcmp.gt.f32.partialorder %v635, 0.0
    %vm645 = vcmp.gt.f32.partialorder %v639, 0.0
    %vm646 = vcmp.gt.f32.partialorder %v641, 0.0
    %v647 = vmul.f32 %v633, 0.1
    %v648 = vmul.f32 %v635, 0.1
    %v649 = vmul.f32 %v639, 0.1
    %v650 = vmul.f32 %v641, 0.1
    %v651 = vsel %vm643, %v633, %v647
    %v652 = vsel %vm644, %v635, %v648
    %v653 = vsel %vm645, %v639, %v649
    %v654 = vsel %vm646, %v641, %v650
    %655 = vst [vmem:[#allocation11] sm:$0xff] %v651
    %656 = vst [vmem:[#allocation11 + $0x8] sm:$0xff] %v652
    %657 = vst [vmem:[#allocation11 + $0x10] sm:$0xff] %v653
    %658 = vst [vmem:[#allocation11 + $0x18] sm:$0xff] %v654
    // Predicated region
    $region66: #{prednet_forward.1} parent=1 // pred_check
      _
    $region67: #{prednet_forward.1} parent=1 // pred_check_branch
      %660 = sbr.rel (0) target = $region69
    $region68: #{prednet_forward.1} parent=1 // pred_region
      %s662 = ssub.s32 512, 512
      %663 = vsyncadd [#allocation4], %s662
      %s664 = sshll.u32 [#allocation11], 4
      %s665 = int_to_ptr.vmem [resolvable:$true] %s664
      %670 = dma.vmem_to_hbm [thread:$0]  %s665, 512, %s11, [#allocation4], 256, 256, 16
    $region69: #{prednet_forward.1} parent=1 // pred_fallthru
      _
    // Predicated region
    $region70: #{prednet_forward.1} parent=1 // pred_check
      _
    $region71: #{prednet_forward.1} parent=1 // pred_check_branch
      %672 = sbr.rel (0) target = $region73
    $region72: #{prednet_forward.1} parent=1 // pred_region
      %673 = dma.done [#allocation4], 512
    $region73: #{prednet_forward.1} parent=1 // pred_fallthru
      _
    %674 = vsyncpa [#allocation3], 1
    %675 = vsyncpa [#allocation6], 1
    %676 = vsyncpa [#allocation9], 1
    %677 = vsyncpa [#allocation4], 1

</llo_original>
